<compile_context>
chip_gen: v6e
topology: v6e:2x2x1
jax: 0.10.0
libtpu: 0.0.40
codegen_flags: <defaults>
</compile_context>

<pallas_src>
import functools

import numpy as np
import jax
import jax.numpy as jnp
from jax import lax
from jax.experimental import pallas as pl
from jax.experimental.pallas import tpu as pltpu


def _round_up(x, m):
    return (x + m - 1) // m * m


def _pick_row_tile(n):
    if n >= 512:
        return 256
    if n >= 128:
        return 128
    return _round_up(max(n, 8), 16)      # bf16 sublane tile is (16, 128)


# ----------------------------------------------------------------------------
# Pallas kernel
# ----------------------------------------------------------------------------
def _angular_loss_kernel(n_ref, a_ref, p_ref, pt_ref, out_ref, acc_ref, *,
                         angle_bound):
    i = pl.program_id(0)
    n_valid = n_ref[0]                       # true number of pairs (runtime scalar)
    tm = a_ref.shape[0]
    n_cols = pt_ref.shape[1]

    @pl.when(i == 0)
    def _init():
        acc_ref[0] = jnp.float32(0.0)        # sum of per-pair angular losses
        acc_ref[1] = jnp.float32(0.0)        # sum of ||a||^2 + ||p||^2

    # f32 copies for the VPU math (term2 / l2).  When the HBM storage is bf16
    # this is just a widening cast; padded rows are exactly zero (fill-gather).
    a = a_ref[...].astype(jnp.float32)       # (tm, d_pad)
    p = p_ref[...].astype(jnp.float32)       # (tm, d_pad)

    # term1[i, j] = (a_i + p_i) . p_j  — single MXU matmul.  Columns j != i are
    # exactly the negatives of pair i (column i is masked below).  The LHS is
    # cast to the storage dtype of positives^T so bf16 x bf16 -> f32 (native
    # MXU path) is used by default; the f32 path is kept for validation.
    lhs = (a + p).astype(pt_ref.dtype)
    term1 = jnp.dot(lhs, pt_ref[...], preferred_element_type=jnp.float32)
    term2 = jnp.sum(a * p, axis=-1, keepdims=True)            # (tm, 1)

    x = (4.0 * angle_bound) * term1 - (2.0 * (1.0 + angle_bound)) * term2

    # Masks built from small iotas: (1, n_cols) column ids + (tm, 1) row ids.
    col_ids = lax.broadcasted_iota(jnp.int32, (1, n_cols), 1)
    row_ids = i * tm + lax.broadcasted_iota(jnp.int32, (tm, 1), 0)
    excluded = (col_ids >= n_valid) | (col_ids == row_ids)    # pad cols | diagonal
    x = jnp.where(excluded, jnp.float32(-1e30), x)

    # loss_i = log(1 + sum_j exp(x_ij)), stabilized with t = max(0, max_j x_ij)
    # (same value as torch's  t + log(exp(-t) + sum_j exp(x_ij - t))).
    t = jnp.maximum(jnp.max(x, axis=1, keepdims=True), 0.0)   # (tm, 1)
    s = t + jnp.log(jnp.exp(-t) +
                    jnp.sum(jnp.exp(x - t), axis=1, keepdims=True))

    row_valid = row_ids < n_valid                              # (tm, 1)
    ang_part = jnp.sum(jnp.where(row_valid, s, 0.0))

    # padded rows of a and p are zero (fill-gather), so they add nothing here
    l2_part = jnp.sum(a * a + p * p)

    acc_ref[0] = acc_ref[0] + ang_part
    acc_ref[1] = acc_ref[1] + l2_part

    @pl.when(i == pl.num_programs(0) - 1)
    def _finalize():
        out_ref[0] = acc_ref[0]
        out_ref[1] = acc_ref[1]


# ----------------------------------------------------------------------------
# Wrapper: fused padded gathers, tiling, grid and final (scalar) combine.
# ----------------------------------------------------------------------------
def angular_loss_pallas(embeddings, anchor_idx, positive_idx, *,
                        angle_bound=1.0, l2_reg=0.02, use_bf16_matmul=True):
    """embeddings: (B, d); anchor/positive_idx: (n,) int  ->  scalar loss."""
    B, d = embeddings.shape
    n = int(anchor_idx.shape[0])

    d_pad = _round_up(d, 128)                 # lane-dense matmul operands
    tm = _pick_row_tile(n)                    # sublane-aligned anchor-row tile
    n_rows = _round_up(n, tm)
    n_cols = max(_round_up(n, 128), 128)      # lane-dense score-matrix columns

    compute_dtype = jnp.bfloat16 if use_bf16_matmul else jnp.float32

    # One pad+cast pass over the embedding table, then fused padded gathers:
    # out-of-bounds pad index B + mode='fill' produces exact zero rows.
    emb = embeddings.astype(compute_dtype)
    if d_pad != d:
        emb = jnp.pad(emb, ((0, 0), (0, d_pad - d)))
    oob = jnp.int32(B)
    a_idx = jnp.full((n_rows,), oob, jnp.int32).at[:n].set(anchor_idx.astype(jnp.int32))
    p_idx = jnp.full((n_rows,), oob, jnp.int32).at[:n].set(positive_idx.astype(jnp.int32))
    c_idx = jnp.full((n_cols,), oob, jnp.int32).at[:n].set(positive_idx.astype(jnp.int32))

    a_pad = jnp.take(emb, a_idx, axis=0, mode='fill', fill_value=0)          # (n_rows, d_pad)
    p_pad = jnp.take(emb, p_idx, axis=0, mode='fill', fill_value=0)          # (n_rows, d_pad)
    pt_pad = jnp.take(emb, c_idx, axis=0, mode='fill', fill_value=0).T       # (d_pad, n_cols)

    n_arr = jnp.asarray([n], dtype=jnp.int32)  # runtime pair count (bucket-friendly)

    # VMEM budget: resident positives^T (single-buffered) + double-buffered
    # a/p tiles + f32 score matrix / temporaries.
    itemsize = jnp.dtype(compute_dtype).itemsize
    vmem_needed = (d_pad * n_cols * itemsize
                   + 2 * 2 * tm * d_pad * itemsize
                   + 4 * tm * n_cols * 4)
    vmem_limit = int(min(max(2 * vmem_needed, 16 * 1024 * 1024),
                         64 * 1024 * 1024))

    kernel = functools.partial(_angular_loss_kernel, angle_bound=float(angle_bound))

    def _build(single_buffer_pt):
        pt_kwargs = dict(pipeline_mode=pl.Buffered(1)) if single_buffer_pt else {}
        grid_spec = pltpu.PrefetchScalarGridSpec(
            num_scalar_prefetch=1,
            grid=(n_rows // tm,),
            in_specs=[
                pl.BlockSpec((tm, d_pad), lambda i, n_sm: (i, 0)),       # anchors tile
                pl.BlockSpec((tm, d_pad), lambda i, n_sm: (i, 0)),       # positives tile
                pl.BlockSpec((d_pad, n_cols), lambda i, n_sm: (0, 0),    # positives^T (resident)
                             **pt_kwargs),
            ],
            out_specs=pl.BlockSpec((2,), lambda i, n_sm: (0,),
                                   memory_space=pltpu.MemorySpace.SMEM),
            scratch_shapes=[pltpu.SMEM((2,), jnp.float32)],
        )
        return pl.pallas_call(
            kernel,
            out_shape=jax.ShapeDtypeStruct((2,), jnp.float32),
            grid_spec=grid_spec,
            compiler_params=pltpu.CompilerParams(
                # The grid axis reduces into the SMEM accumulator -> serial.
                dimension_semantics=("arbitrary",),
                vmem_limit_bytes=vmem_limit,
            ),
        )

    try:
        sums = _build(True)(n_arr, a_pad, p_pad, pt_pad)
    except Exception:
        # Fallback for JAX versions without pipeline_mode=pl.Buffered(1):
        # identical kernel, default double-buffered positives^T.
        sums = _build(False)(n_arr, a_pad, p_pad, pt_pad)

    ang_sum = sums[0]
    l2_sum = sums[1]
    # mean over the TRUE number of pairs, not the padded count.
    return (ang_sum + l2_reg * l2_sum) / jnp.float32(n)


# ----------------------------------------------------------------------------
# Host-side glue: replicate AngularLoss.get_n_pairs (numpy RNG, as in torch).
# ----------------------------------------------------------------------------
def get_n_pairs(labels_np):
    n_pairs = []
    for label in np.unique(labels_np):
        label_indices = np.where(labels_np == label)[0]
        if len(label_indices) < 2:
            continue
        anchor, positive = np.random.choice(label_indices, 2, replace=False)
        n_pairs.append([anchor, positive])
    n_pairs = np.array(n_pairs)
    n_negatives = []
    for i in range(len(n_pairs)):
        negative = np.concatenate([n_pairs[:i, 1], n_pairs[i + 1:, 1]])
        n_negatives.append(negative)
    n_negatives = np.array(n_negatives)
    return n_pairs.astype(np.int32), n_negatives.astype(np.int32)


def angular_loss_forward(embeddings, labels_np, *, angle_bound=1.0, l2_reg=0.02,
                         use_bf16_matmul=True):
    n_pairs, _ = get_n_pairs(np.asarray(labels_np))   # negatives tensor not needed
    anchor_idx = jnp.asarray(n_pairs[:, 0])
    positive_idx = jnp.asarray(n_pairs[:, 1])
    return angular_loss_pallas(embeddings, anchor_idx, positive_idx,
                               angle_bound=angle_bound, l2_reg=l2_reg,
                               use_bf16_matmul=use_bf16_matmul)


# Pure-numpy float64 reference mirroring the torch math (explicit negatives
# tensor, exactly as the PyTorch module does) — precision-independent oracle.
def _reference_numpy(anchors, positives, negatives, angle_bound, l2_reg):
    a = anchors[:, None, :].astype(np.float64)
    p = positives[:, None, :].astype(np.float64)
    neg = negatives.astype(np.float64)
    x = 4.0 * angle_bound * np.matmul(a + p, np.swapaxes(neg, 1, 2)) \
        - 2.0 * (1.0 + angle_bound) * np.matmul(a, np.swapaxes(p, 1, 2))
    t = np.max(x, axis=2)                                   # (n, 1)
    s = np.log(np.exp(-t) + np.sum(np.exp(x - t[:, :, None]), axis=2))
    ang = np.mean(t + s)
    l2 = np.sum(anchors.astype(np.float64) ** 2
                + positives.astype(np.float64) ** 2) / anchors.shape[0]
    return float(ang + l2_reg * l2)


if __name__ == "__main__":
    np.random.seed(0)

    # cfg.LOSSES.ANGULAR_LOSS.* — deterministic synthetic config values.
    ANGLE_BOUND = 1.0
    L2_REG = 0.02
    # LAMBDA_AND is unused in forward().

    B, D = 8, 32                                   # batch of 8 embeddings, dim 32
    labels = np.array([0, 0, 1, 1, 2, 2, 3, 3], dtype=np.int64)

    key = jax.random.PRNGKey(0)
    embeddings = jax.random.normal(key, (B, D), dtype=jnp.float32)
    embeddings = embeddings / jnp.linalg.norm(embeddings, axis=1, keepdims=True)

    # Fixed pair/negative sampling (host numpy RNG, exactly as in the module).
    n_pairs, n_negatives = get_n_pairs(labels)
    anchor_idx = jnp.asarray(n_pairs[:, 0])
    positive_idx = jnp.asarray(n_pairs[:, 1])

    # Default (bf16 MXU) path.
    loss_bf16 = angular_loss_pallas(embeddings, anchor_idx, positive_idx,
                                    angle_bound=ANGLE_BOUND, l2_reg=L2_REG)
    loss_bf16 = float(jax.block_until_ready(loss_bf16))

    # f32 validation path (same kernel, f32 storage/matmul).
    loss_f32 = angular_loss_pallas(embeddings, anchor_idx, positive_idx,
                                   angle_bound=ANGLE_BOUND, l2_reg=L2_REG,
                                   use_bf16_matmul=False)
    loss_f32 = float(jax.block_until_ready(loss_f32))

    emb_np = np.asarray(embeddings, dtype=np.float64)
    ref = _reference_numpy(emb_np[n_pairs[:, 0]], emb_np[n_pairs[:, 1]],
                           emb_np[n_negatives], ANGLE_BOUND, L2_REG)

    assert np.allclose(loss_f32, ref, rtol=3e-2, atol=3e-2), (loss_f32, ref)
    assert np.allclose(loss_bf16, ref, rtol=3e-2, atol=3e-2), (loss_bf16, ref)

    print("KERNEL_OK")
</pallas_src>

<mosaic_0001>
module attributes {stable_mosaic.version = 11 : i64} {
  func.func @_angular_loss_kernel(%arg0: i32, %arg1: memref<1xi32, #tpu.memory_space<smem>>, %arg2: memref<16x128xbf16, #tpu.memory_space<vmem>>, %arg3: memref<16x128xbf16, #tpu.memory_space<vmem>>, %arg4: memref<128x128xbf16, #tpu.memory_space<vmem>>, %arg5: memref<2xf32, #tpu.memory_space<smem>>, %arg6: memref<2xf32, #tpu.memory_space<smem>>) attributes {dimension_semantics = [#tpu.dimension_semantics<arbitrary>], iteration_bounds = array<i64: 1>, scalar_prefetch = 1 : i64, scratch_operands = 1 : i64, tpu.core_type = #tpu.core_type<tc>, window_params = [{transform_indices = @transform_0, window_bounds = array<i64: 16, 128>}, {transform_indices = @transform_1, window_bounds = array<i64: 16, 128>}, {pipeline_mode = #tpu.pipeline_mode<synchronous>, transform_indices = @transform_2, window_bounds = array<i64: 128, 128>}, {transform_indices = @transform_3, window_bounds = array<i64: 2>}]} {
    %c0 = arith.constant 0 : index
    %0 = memref.load %arg1[%c0] : memref<1xi32, #tpu.memory_space<smem>>
    %c0_i32 = arith.constant 0 : i32
    %1 = arith.cmpi eq, %arg0, %c0_i32 : i32
    %2 = arith.extui %1 : i1 to i32
    %c0_i32_0 = arith.constant 0 : i32
    %3 = arith.cmpi ne, %2, %c0_i32_0 : i32
    scf.if %3 {
      %cst_23 = arith.constant 0.000000e+00 : f32
      %c0_24 = arith.constant 0 : index
      %74 = memref.load %arg6[%c0_24] : memref<2xf32, #tpu.memory_space<smem>>
      memref.store %cst_23, %arg6[%c0_24] : memref<2xf32, #tpu.memory_space<smem>>
      %cst_25 = arith.constant 0.000000e+00 : f32
      %c1_26 = arith.constant 1 : index
      %75 = memref.load %arg6[%c1_26] : memref<2xf32, #tpu.memory_space<smem>>
      memref.store %cst_25, %arg6[%c1_26] : memref<2xf32, #tpu.memory_space<smem>>
    } else {
    }
    %c0_1 = arith.constant 0 : index
    %c0_2 = arith.constant 0 : index
    %4 = vector.load %arg2[%c0_1, %c0_2] : memref<16x128xbf16, #tpu.memory_space<vmem>>, vector<16x128xbf16>
    %5 = arith.extf %4 : vector<16x128xbf16> to vector<16x128xf32>
    %c0_3 = arith.constant 0 : index
    %c0_4 = arith.constant 0 : index
    %6 = vector.load %arg3[%c0_3, %c0_4] : memref<16x128xbf16, #tpu.memory_space<vmem>>, vector<16x128xbf16>
    %7 = arith.extf %6 : vector<16x128xbf16> to vector<16x128xf32>
    %8 = arith.addf %5, %7 : vector<16x128xf32>
    %9 = arith.truncf %8 : vector<16x128xf32> to vector<16x128xbf16>
    %c0_5 = arith.constant 0 : index
    %c0_6 = arith.constant 0 : index
    %10 = vector.load %arg4[%c0_5, %c0_6] : memref<128x128xbf16, #tpu.memory_space<vmem>>, vector<128x128xbf16>
    %cst = arith.constant dense<0.000000e+00> : vector<16x128xf32>
    %11 = tpu.matmul %9, %10, %cst {dimension_numbers = #tpu.dot_dimension_numbers<[1], [0], [0], [1], [0, 0, 1, 1], [], []>} : vector<16x128xbf16>, vector<128x128xbf16>, vector<16x128xf32> -> vector<16x128xf32>
    %12 = arith.mulf %5, %7 : vector<16x128xf32>
    %cst_7 = arith.constant dense<0.000000e+00> : vector<16xf32>
    %13 = vector.multi_reduction <add>, %12, %cst_7 [1] : vector<16x128xf32> to vector<16xf32>
    %14 = vector.shape_cast %13 : vector<16xf32> to vector<16x1xf32>
    %cst_8 = arith.constant 4.000000e+00 : f32
    %15 = vector.broadcast %cst_8 : f32 to vector<16x128xf32>
    %16 = arith.mulf %15, %11 : vector<16x128xf32>
    %cst_9 = arith.constant 4.000000e+00 : f32
    %17 = vector.broadcast %cst_9 : f32 to vector<16x1xf32>
    %18 = arith.mulf %17, %14 : vector<16x1xf32>
    %19 = vector.broadcast %18 : vector<16x1xf32> to vector<16x128xf32>
    %20 = arith.subf %16, %19 : vector<16x128xf32>
    %21 = tpu.iota {dimensions = array<i32: 1>} : vector<1x128xi32>
    %c16_i32 = arith.constant 16 : i32
    %22 = arith.muli %arg0, %c16_i32 : i32
    %23 = tpu.iota {dimensions = array<i32: 0>} : vector<16x1xi32>
    %24 = vector.broadcast %22 : i32 to vector<16x1xi32>
    %25 = arith.addi %24, %23 : vector<16x1xi32>
    %26 = vector.broadcast %0 : i32 to vector<1x128xi32>
    %27 = arith.cmpi sge, %21, %26 : vector<1x128xi32>
    %28 = vector.broadcast %21 : vector<1x128xi32> to vector<16x128xi32>
    %29 = vector.broadcast %25 : vector<16x1xi32> to vector<16x128xi32>
    %30 = arith.cmpi eq, %28, %29 : vector<16x128xi32>
    %31 = vector.broadcast %27 : vector<1x128xi1> to vector<16x128xi1>
    %32 = arith.ori %31, %30 : vector<16x128xi1>
    %cst_10 = arith.constant -1.000000e+30 : f32
    %33 = vector.broadcast %cst_10 : f32 to vector<16x128xf32>
    %34 = arith.select %32, %33, %20 : vector<16x128xi1>, vector<16x128xf32>
    %cst_11 = arith.constant dense<0xFF800000> : vector<16xf32>
    %35 = vector.multi_reduction <maximumf>, %34, %cst_11 [1] : vector<16x128xf32> to vector<16xf32>
    %36 = vector.shape_cast %35 : vector<16xf32> to vector<16x1xf32>
    %cst_12 = arith.constant 0.000000e+00 : f32
    %37 = vector.broadcast %cst_12 : f32 to vector<16x1xf32>
    %38 = arith.maximumf %36, %37 : vector<16x1xf32>
    %cst_13 = arith.constant 0.000000e+00 : f32
    %39 = vector.broadcast %cst_13 : f32 to vector<16x1xf32>
    %40 = arith.subf %39, %38 : vector<16x1xf32>
    %41 = math.exp %40 : vector<16x1xf32>
    %42 = vector.broadcast %38 : vector<16x1xf32> to vector<16x128xf32>
    %43 = arith.subf %34, %42 : vector<16x128xf32>
    %44 = math.exp %43 : vector<16x128xf32>
    %cst_14 = arith.constant dense<0.000000e+00> : vector<16xf32>
    %45 = vector.multi_reduction <add>, %44, %cst_14 [1] : vector<16x128xf32> to vector<16xf32>
    %46 = vector.shape_cast %45 : vector<16xf32> to vector<16x1xf32>
    %47 = arith.addf %41, %46 : vector<16x1xf32>
    %48 = math.log %47 : vector<16x1xf32>
    %49 = arith.addf %38, %48 : vector<16x1xf32>
    %50 = vector.broadcast %0 : i32 to vector<16x1xi32>
    %51 = arith.cmpi slt, %25, %50 : vector<16x1xi32>
    %cst_15 = arith.constant 0.000000e+00 : f32
    %52 = vector.broadcast %cst_15 : f32 to vector<16x1xf32>
    %53 = arith.select %51, %49, %52 : vector<16x1xi1>, vector<16x1xf32>
    %54 = vector.shape_cast %53 : vector<16x1xf32> to vector<1x16x1xf32>
    %cst_16 = arith.constant dense<0.000000e+00> : vector<1xf32>
    %55 = vector.multi_reduction <add>, %54, %cst_16 [1, 2] : vector<1x16x1xf32> to vector<1xf32>
    %56 = vector.shape_cast %55 : vector<1xf32> to vector<1x1x1xf32>
    %57 = vector.extract %56[0, 0, 0] : f32 from vector<1x1x1xf32>
    %58 = arith.mulf %5, %5 : vector<16x128xf32>
    %59 = arith.mulf %7, %7 : vector<16x128xf32>
    %60 = arith.addf %58, %59 : vector<16x128xf32>
    %61 = vector.shape_cast %60 : vector<16x128xf32> to vector<1x16x128xf32>
    %cst_17 = arith.constant dense<0.000000e+00> : vector<1xf32>
    %62 = vector.multi_reduction <add>, %61, %cst_17 [1, 2] : vector<1x16x128xf32> to vector<1xf32>
    %63 = vector.shape_cast %62 : vector<1xf32> to vector<1x1x1xf32>
    %64 = vector.extract %63[0, 0, 0] : f32 from vector<1x1x1xf32>
    %c0_18 = arith.constant 0 : index
    %65 = memref.load %arg6[%c0_18] : memref<2xf32, #tpu.memory_space<smem>>
    %66 = arith.addf %65, %57 : f32
    %c0_19 = arith.constant 0 : index
    %67 = memref.load %arg6[%c0_19] : memref<2xf32, #tpu.memory_space<smem>>
    memref.store %66, %arg6[%c0_19] : memref<2xf32, #tpu.memory_space<smem>>
    %c1 = arith.constant 1 : index
    %68 = memref.load %arg6[%c1] : memref<2xf32, #tpu.memory_space<smem>>
    %69 = arith.addf %68, %64 : f32
    %c1_20 = arith.constant 1 : index
    %70 = memref.load %arg6[%c1_20] : memref<2xf32, #tpu.memory_space<smem>>
    memref.store %69, %arg6[%c1_20] : memref<2xf32, #tpu.memory_space<smem>>
    %c0_i32_21 = arith.constant 0 : i32
    %71 = arith.cmpi eq, %arg0, %c0_i32_21 : i32
    %72 = arith.extui %71 : i1 to i32
    %c0_i32_22 = arith.constant 0 : i32
    %73 = arith.cmpi ne, %72, %c0_i32_22 : i32
    scf.if %73 {
      %c0_23 = arith.constant 0 : index
      %74 = memref.load %arg6[%c0_23] : memref<2xf32, #tpu.memory_space<smem>>
      %c0_24 = arith.constant 0 : index
      %75 = memref.load %arg5[%c0_24] : memref<2xf32, #tpu.memory_space<smem>>
      memref.store %74, %arg5[%c0_24] : memref<2xf32, #tpu.memory_space<smem>>
      %c1_25 = arith.constant 1 : index
      %76 = memref.load %arg6[%c1_25] : memref<2xf32, #tpu.memory_space<smem>>
      %c1_26 = arith.constant 1 : index
      %77 = memref.load %arg5[%c1_26] : memref<2xf32, #tpu.memory_space<smem>>
      memref.store %76, %arg5[%c1_26] : memref<2xf32, #tpu.memory_space<smem>>
    } else {
    }
    return
  }
  func.func @transform_0(%arg0: i32, %arg1: memref<1xi32, #tpu.memory_space<smem>>) -> (i32, i32) {
    %c0_i32 = arith.constant 0 : i32
    %c0_i32_0 = arith.constant 0 : i32
    return %arg0, %c0_i32 : i32, i32
  }
  func.func @transform_1(%arg0: i32, %arg1: memref<1xi32, #tpu.memory_space<smem>>) -> (i32, i32) {
    %c0_i32 = arith.constant 0 : i32
    %c0_i32_0 = arith.constant 0 : i32
    return %arg0, %c0_i32 : i32, i32
  }
  func.func @transform_2(%arg0: i32, %arg1: memref<1xi32, #tpu.memory_space<smem>>) -> (i32, i32) {
    %c0_i32 = arith.constant 0 : i32
    %c0_i32_0 = arith.constant 0 : i32
    %c0_i32_1 = arith.constant 0 : i32
    return %c0_i32, %c0_i32_0 : i32, i32
  }
  func.func @transform_3(%arg0: i32, %arg1: memref<1xi32, #tpu.memory_space<smem>>) -> i32 {
    %c0_i32 = arith.constant 0 : i32
    %c0_i32_0 = arith.constant 0 : i32
    return %c0_i32 : i32
  }
}

module attributes {stable_mosaic.version = 11 : i64} {
  func.func @_angular_loss_kernel(%arg0: i32, %arg1: memref<1xi32, #tpu.memory_space<smem>>, %arg2: memref<16x128xbf16, #tpu.memory_space<vmem>>, %arg3: memref<16x128xbf16, #tpu.memory_space<vmem>>, %arg4: memref<128x128xbf16, #tpu.memory_space<vmem>>, %arg5: memref<2xf32, #tpu.memory_space<smem>>, %arg6: memref<2xf32, #tpu.memory_space<smem>>) attributes {dimension_semantics = [#tpu.dimension_semantics<arbitrary>], iteration_bounds = array<i64: 1>, scalar_prefetch = 1 : i64, scratch_operands = 1 : i64, tpu.core_type = #tpu.core_type<tc>, window_params = [{transform_indices = @transform_0, window_bounds = array<i64: 16, 128>}, {transform_indices = @transform_1, window_bounds = array<i64: 16, 128>}, {pipeline_mode = #tpu.pipeline_mode<synchronous>, transform_indices = @transform_2, window_bounds = array<i64: 128, 128>}, {transform_indices = @transform_3, window_bounds = array<i64: 2>}]} {
    %c0 = arith.constant 0 : index
    %0 = memref.load %arg1[%c0] : memref<1xi32, #tpu.memory_space<smem>>
    %c0_i32 = arith.constant 0 : i32
    %1 = arith.cmpi eq, %arg0, %c0_i32 : i32
    %2 = arith.extui %1 : i1 to i32
    %c0_i32_0 = arith.constant 0 : i32
    %3 = arith.cmpi ne, %2, %c0_i32_0 : i32
    scf.if %3 {
      %cst_23 = arith.constant 0.000000e+00 : f32
      %c0_24 = arith.constant 0 : index
      %74 = memref.load %arg6[%c0_24] : memref<2xf32, #tpu.memory_space<smem>>
      memref.store %cst_23, %arg6[%c0_24] : memref<2xf32, #tpu.memory_space<smem>>
      %cst_25 = arith.constant 0.000000e+00 : f32
      %c1_26 = arith.constant 1 : index
      %75 = memref.load %arg6[%c1_26] : memref<2xf32, #tpu.memory_space<smem>>
      memref.store %cst_25, %arg6[%c1_26] : memref<2xf32, #tpu.memory_space<smem>>
    } else {
    }
    %c0_1 = arith.constant 0 : index
    %c0_2 = arith.constant 0 : index
    %4 = vector.load %arg2[%c0_1, %c0_2] : memref<16x128xbf16, #tpu.memory_space<vmem>>, vector<16x128xbf16>
    %5 = arith.extf %4 : vector<16x128xbf16> to vector<16x128xf32>
    %c0_3 = arith.constant 0 : index
    %c0_4 = arith.constant 0 : index
    %6 = vector.load %arg3[%c0_3, %c0_4] : memref<16x128xbf16, #tpu.memory_space<vmem>>, vector<16x128xbf16>
    %7 = arith.extf %6 : vector<16x128xbf16> to vector<16x128xf32>
    %8 = arith.addf %5, %7 : vector<16x128xf32>
    %9 = arith.truncf %8 : vector<16x128xf32> to vector<16x128xbf16>
    %c0_5 = arith.constant 0 : index
    %c0_6 = arith.constant 0 : index
    %10 = vector.load %arg4[%c0_5, %c0_6] : memref<128x128xbf16, #tpu.memory_space<vmem>>, vector<128x128xbf16>
    %cst = arith.constant dense<0.000000e+00> : vector<16x128xf32>
    %11 = tpu.matmul %9, %10, %cst {dimension_numbers = #tpu.dot_dimension_numbers<[1], [0], [0], [1], [0, 0, 1, 1], [], []>} : vector<16x128xbf16>, vector<128x128xbf16>, vector<16x128xf32> -> vector<16x128xf32>
    %12 = arith.mulf %5, %7 : vector<16x128xf32>
    %cst_7 = arith.constant dense<0.000000e+00> : vector<16xf32>
    %13 = vector.multi_reduction <add>, %12, %cst_7 [1] : vector<16x128xf32> to vector<16xf32>
    %14 = vector.shape_cast %13 : vector<16xf32> to vector<16x1xf32>
    %cst_8 = arith.constant 4.000000e+00 : f32
    %15 = vector.broadcast %cst_8 : f32 to vector<16x128xf32>
    %16 = arith.mulf %15, %11 : vector<16x128xf32>
    %cst_9 = arith.constant 4.000000e+00 : f32
    %17 = vector.broadcast %cst_9 : f32 to vector<16x1xf32>
    %18 = arith.mulf %17, %14 : vector<16x1xf32>
    %19 = vector.broadcast %18 : vector<16x1xf32> to vector<16x128xf32>
    %20 = arith.subf %16, %19 : vector<16x128xf32>
    %21 = tpu.iota {dimensions = array<i32: 1>} : vector<1x128xi32>
    %c16_i32 = arith.constant 16 : i32
    %22 = arith.muli %arg0, %c16_i32 : i32
    %23 = tpu.iota {dimensions = array<i32: 0>} : vector<16x1xi32>
    %24 = vector.broadcast %22 : i32 to vector<16x1xi32>
    %25 = arith.addi %24, %23 : vector<16x1xi32>
    %26 = vector.broadcast %0 : i32 to vector<1x128xi32>
    %27 = arith.cmpi sge, %21, %26 : vector<1x128xi32>
    %28 = vector.broadcast %21 : vector<1x128xi32> to vector<16x128xi32>
    %29 = vector.broadcast %25 : vector<16x1xi32> to vector<16x128xi32>
    %30 = arith.cmpi eq, %28, %29 : vector<16x128xi32>
    %31 = vector.broadcast %27 : vector<1x128xi1> to vector<16x128xi1>
    %32 = arith.ori %31, %30 : vector<16x128xi1>
    %cst_10 = arith.constant -1.000000e+30 : f32
    %33 = vector.broadcast %cst_10 : f32 to vector<16x128xf32>
    %34 = arith.select %32, %33, %20 : vector<16x128xi1>, vector<16x128xf32>
    %cst_11 = arith.constant dense<0xFF800000> : vector<16xf32>
    %35 = vector.multi_reduction <maximumf>, %34, %cst_11 [1] : vector<16x128xf32> to vector<16xf32>
    %36 = vector.shape_cast %35 : vector<16xf32> to vector<16x1xf32>
    %cst_12 = arith.constant 0.000000e+00 : f32
    %37 = vector.broadcast %cst_12 : f32 to vector<16x1xf32>
    %38 = arith.maximumf %36, %37 : vector<16x1xf32>
    %cst_13 = arith.constant 0.000000e+00 : f32
    %39 = vector.broadcast %cst_13 : f32 to vector<16x1xf32>
    %40 = arith.subf %39, %38 : vector<16x1xf32>
    %41 = math.exp %40 : vector<16x1xf32>
    %42 = vector.broadcast %38 : vector<16x1xf32> to vector<16x128xf32>
    %43 = arith.subf %34, %42 : vector<16x128xf32>
    %44 = math.exp %43 : vector<16x128xf32>
    %cst_14 = arith.constant dense<0.000000e+00> : vector<16xf32>
    %45 = vector.multi_reduction <add>, %44, %cst_14 [1] : vector<16x128xf32> to vector<16xf32>
    %46 = vector.shape_cast %45 : vector<16xf32> to vector<16x1xf32>
    %47 = arith.addf %41, %46 : vector<16x1xf32>
    %48 = math.log %47 : vector<16x1xf32>
    %49 = arith.addf %38, %48 : vector<16x1xf32>
    %50 = vector.broadcast %0 : i32 to vector<16x1xi32>
    %51 = arith.cmpi slt, %25, %50 : vector<16x1xi32>
    %cst_15 = arith.constant 0.000000e+00 : f32
    %52 = vector.broadcast %cst_15 : f32 to vector<16x1xf32>
    %53 = arith.select %51, %49, %52 : vector<16x1xi1>, vector<16x1xf32>
    %54 = vector.shape_cast %53 : vector<16x1xf32> to vector<1x16x1xf32>
    %cst_16 = arith.constant dense<0.000000e+00> : vector<1xf32>
    %55 = vector.multi_reduction <add>, %54, %cst_16 [1, 2] : vector<1x16x1xf32> to vector<1xf32>
    %56 = vector.shape_cast %55 : vector<1xf32> to vector<1x1x1xf32>
    %57 = vector.extract %56[0, 0, 0] : f32 from vector<1x1x1xf32>
    %58 = arith.mulf %5, %5 : vector<16x128xf32>
    %59 = arith.mulf %7, %7 : vector<16x128xf32>
    %60 = arith.addf %58, %59 : vector<16x128xf32>
    %61 = vector.shape_cast %60 : vector<16x128xf32> to vector<1x16x128xf32>
    %cst_17 = arith.constant dense<0.000000e+00> : vector<1xf32>
    %62 = vector.multi_reduction <add>, %61, %cst_17 [1, 2] : vector<1x16x128xf32> to vector<1xf32>
    %63 = vector.shape_cast %62 : vector<1xf32> to vector<1x1x1xf32>
    %64 = vector.extract %63[0, 0, 0] : f32 from vector<1x1x1xf32>
    %c0_18 = arith.constant 0 : index
    %65 = memref.load %arg6[%c0_18] : memref<2xf32, #tpu.memory_space<smem>>
    %66 = arith.addf %65, %57 : f32
    %c0_19 = arith.constant 0 : index
    %67 = memref.load %arg6[%c0_19] : memref<2xf32, #tpu.memory_space<smem>>
    memref.store %66, %arg6[%c0_19] : memref<2xf32, #tpu.memory_space<smem>>
    %c1 = arith.constant 1 : index
    %68 = memref.load %arg6[%c1] : memref<2xf32, #tpu.memory_space<smem>>
    %69 = arith.addf %68, %64 : f32
    %c1_20 = arith.constant 1 : index
    %70 = memref.load %arg6[%c1_20] : memref<2xf32, #tpu.memory_space<smem>>
    memref.store %69, %arg6[%c1_20] : memref<2xf32, #tpu.memory_space<smem>>
    %c0_i32_21 = arith.constant 0 : i32
    %71 = arith.cmpi eq, %arg0, %c0_i32_21 : i32
    %72 = arith.extui %71 : i1 to i32
    %c0_i32_22 = arith.constant 0 : i32
    %73 = arith.cmpi ne, %72, %c0_i32_22 : i32
    scf.if %73 {
      %c0_23 = arith.constant 0 : index
      %74 = memref.load %arg6[%c0_23] : memref<2xf32, #tpu.memory_space<smem>>
      %c0_24 = arith.constant 0 : index
      %75 = memref.load %arg5[%c0_24] : memref<2xf32, #tpu.memory_space<smem>>
      memref.store %74, %arg5[%c0_24] : memref<2xf32, #tpu.memory_space<smem>>
      %c1_25 = arith.constant 1 : index
      %76 = memref.load %arg6[%c1_25] : memref<2xf32, #tpu.memory_space<smem>>
      %c1_26 = arith.constant 1 : index
      %77 = memref.load %arg5[%c1_26] : memref<2xf32, #tpu.memory_space<smem>>
      memref.store %76, %arg5[%c1_26] : memref<2xf32, #tpu.memory_space<smem>>
    } else {
    }
    return
  }
  func.func @transform_0(%arg0: i32, %arg1: memref<1xi32, #tpu.memory_space<smem>>) -> (i32, i32) {
    %c0_i32 = arith.constant 0 : i32
    %c0_i32_0 = arith.constant 0 : i32
    return %arg0, %c0_i32 : i32, i32
  }
  func.func @transform_1(%arg0: i32, %arg1: memref<1xi32, #tpu.memory_space<smem>>) -> (i32, i32) {
    %c0_i32 = arith.constant 0 : i32
    %c0_i32_0 = arith.constant 0 : i32
    return %arg0, %c0_i32 : i32, i32
  }
  func.func @transform_2(%arg0: i32, %arg1: memref<1xi32, #tpu.memory_space<smem>>) -> (i32, i32) {
    %c0_i32 = arith.constant 0 : i32
    %c0_i32_0 = arith.constant 0 : i32
    %c0_i32_1 = arith.constant 0 : i32
    return %c0_i32, %c0_i32_0 : i32, i32
  }
  func.func @transform_3(%arg0: i32, %arg1: memref<1xi32, #tpu.memory_space<smem>>) -> i32 {
    %c0_i32 = arith.constant 0 : i32
    %c0_i32_0 = arith.constant 0 : i32
    return %c0_i32 : i32
  }
}

</mosaic_0001>

<llo_original>
// kernel: tpu_custom_call.1
$region0: #{tpu_custom_call.1}
  #allocation0 [shape = 'u32[]', space=smem, size = 0x4, offset = 0x4, fixed_abs, tag = 'smem constant byte address 0x4 - core index']
  #allocation1 [shape = 'u32[144,128]{1,0:T(1,128)}', space=vmem, size = 0x12000, scoped, tag = 'internal scratch']
  #allocation2 [shape = 'f32[2]{0:T(128)}', space=smem, size = 0x200, scoped, tag = 'scratch operand']
  #allocation3 [shape = 's32[1]{0}', space=sflag, size = 0x4, scoped, tag = 'scoped memory for tpu_custom_call.1']
  #allocation4 [shape = 's32[1]{0:T(128)S(6)}', space=smem, size = 0x200, scoped, tag = 'prefetched SMEM operand 0']
  %s0 = inlined_call_operand.<no memory space> [shape: s32[1], index: 0, kind: input, shape index: {}]
  %s1 = inlined_call_operand.hbm [shape: bf16[16,128], index: 1, kind: input, shape index: {}]
  %s2 = inlined_call_operand.hbm [shape: bf16[16,128], index: 2, kind: input, shape index: {}]
  %s3 = inlined_call_operand.hbm [shape: bf16[128,128], index: 3, kind: input, shape index: {}]
  %s4 = inlined_call_operand.hbm [shape: f32[2], index: 4, kind: output, shape index: {}]
  %s5 = sld [smem:[#allocation0]]
  $region42: #{tpu_custom_call.1} parent=0
    _
  %s7 = ssub.s32 1, %s5
  %s8 = scalar_select 0, %s7, %s5
  %9 = sst [smem:[#allocation4]] %s0
  $region1: #{tpu_custom_call.1} parent=0
    #allocation5 [shape = 'u8[4096]{0}', space=vmem, size = 0x1000, scoped, tag = 'input window, operand 1, single buffered']
    #allocation6 [shape = 's32[1]{0}', space=sflag, size = 0x4, scoped, tag = 'scoped memory for tpu_custom_call.1']
    #allocation7 [shape = 's32[1]{0}', space=sflag, size = 0x4, scoped, tag = 'scoped memory for tpu_custom_call.1']
    #allocation8 [shape = 'u8[4096]{0}', space=vmem, size = 0x1000, scoped, tag = 'input window, operand 2, single buffered']
    #allocation9 [shape = 's32[1]{0}', space=sflag, size = 0x4, scoped, tag = 'scoped memory for tpu_custom_call.1']
    #allocation10 [shape = 'u8[32768]{0}', space=vmem, size = 0x8000, scoped, tag = 'input window, operand 3, single buffered']
    #allocation11 [shape = 'u8[512]{0}', space=smem, size = 0x200, scoped, tag = 'output window, operand 0, single buffered']
    %10 = vsyncpa [#allocation6], 0
    %11 = vsyncpa [#allocation9], 0
    %12 = vsyncpa [#allocation7], 0
    // Predicated region
    $region2: #{tpu_custom_call.1} parent=1 // pred_check
      _
    $region3: #{tpu_custom_call.1} parent=1 // pred_check_branch
      %14 = sbr.rel (0) target = $region5
    $region4: #{tpu_custom_call.1} parent=1 // pred_region
      %s16 = ssub.s32 128, 128
      %17 = vsyncadd [#allocation6], %s16
      %s18 = sshll.u32 [#allocation5], 4
      %s19 = int_to_ptr.vmem [resolvable:$true] %s18
      %24 = dma.hbm_to_vmem [thread:$0]  %s1, 128, %s19, [#allocation6], 64, 64, 4
    $region5: #{tpu_custom_call.1} parent=1 // pred_fallthru
      _
    // Predicated region
    $region6: #{tpu_custom_call.1} parent=1 // pred_check
      _
    $region7: #{tpu_custom_call.1} parent=1 // pred_check_branch
      %26 = sbr.rel (0) target = $region9
    $region8: #{tpu_custom_call.1} parent=1 // pred_region
      %s28 = ssub.s32 128, 128
      %29 = vsyncadd [#allocation9], %s28
      %s30 = sshll.u32 [#allocation8], 4
      %s31 = int_to_ptr.vmem [resolvable:$true] %s30
      %36 = dma.hbm_to_vmem [thread:$0]  %s2, 128, %s31, [#allocation9], 64, 64, 4
    $region9: #{tpu_custom_call.1} parent=1 // pred_fallthru
      _
    // Predicated region
    $region10: #{tpu_custom_call.1} parent=1 // pred_check
      _
    $region11: #{tpu_custom_call.1} parent=1 // pred_check_branch
      %38 = sbr.rel (0) target = $region13
    $region12: #{tpu_custom_call.1} parent=1 // pred_region
      %s40 = ssub.s32 1024, 1024
      %41 = vsyncadd [#allocation9], %s40
      %s42 = sshll.u32 [#allocation10], 4
      %s43 = int_to_ptr.vmem [resolvable:$true] %s42
      %48 = dma.hbm_to_vmem [thread:$0]  %s3, 1024, %s43, [#allocation9], 64, 64, 4
    $region13: #{tpu_custom_call.1} parent=1 // pred_fallthru
      _
    // Predicated region
    $region14: #{tpu_custom_call.1} parent=1 // pred_check
      _
    $region15: #{tpu_custom_call.1} parent=1 // pred_check_branch
      %50 = sbr.rel (0) target = $region17
    $region16: #{tpu_custom_call.1} parent=1 // pred_region
      %51 = dma.done [#allocation6], 128
    $region17: #{tpu_custom_call.1} parent=1 // pred_fallthru
      _
    // Predicated region
    $region18: #{tpu_custom_call.1} parent=1 // pred_check
      _
    $region19: #{tpu_custom_call.1} parent=1 // pred_check_branch
      %53 = sbr.rel (0) target = $region21
    $region20: #{tpu_custom_call.1} parent=1 // pred_region
      %54 = dma.done [#allocation9], 128
    $region21: #{tpu_custom_call.1} parent=1 // pred_fallthru
      _
    // Predicated region
    $region22: #{tpu_custom_call.1} parent=1 // pred_check
      _
    $region23: #{tpu_custom_call.1} parent=1 // pred_check_branch
      %56 = sbr.rel (0) target = $region25
    $region24: #{tpu_custom_call.1} parent=1 // pred_region
      %57 = dma.done [#allocation9], 1024
    $region25: #{tpu_custom_call.1} parent=1 // pred_fallthru
      _
    %s59 = sld [smem:[#allocation4]]
    %p60 = scmp.eq.s32.totalorder 0, 0
    // Predicated region
    $region26: #{tpu_custom_call.1} parent=1 // pred_check
      %p61 = pneg %p60
    $region27: #{tpu_custom_call.1} parent=1 // pred_check_branch
      %63 = sbr.rel (%p61) target = $region29
    $region28: #{tpu_custom_call.1} parent=1 // pred_region
      %s64 = scalar_lea.smem [#allocation2], 0
      %65 = sst [smem:[%s64]] 0.0
      %s66 = scalar_lea.smem [#allocation2], 1
      %67 = sst [smem:[%s66]] 0.0
    $region29: #{tpu_custom_call.1} parent=1 // pred_fallthru
      _
    %v68 = vld [vmem:[#allocation5] sm:$0xf]
    %v69 = vld [vmem:[#allocation5 + $0x4] sm:$0xf]
    %v70 = vunpack.c.l.bf16 %v68
    %v71 = vunpack.c.l.bf16 %v69
    %v72 = vld [vmem:[#allocation8] sm:$0xf]
    %v73 = vld [vmem:[#allocation8 + $0x4] sm:$0xf]
    %v74 = vunpack.c.l.bf16 %v72
    %v75 = vunpack.c.l.bf16 %v73
    %v76 = vadd.f32 %v70, %v74
    %v77 = vadd.f32 %v71, %v75
    %v78 = vpack.c.bf16 %v77, %v76
    %v79 = vld [vmem:[#allocation10] sm:$0xf]
    %v80 = vld [vmem:[#allocation10 + $0x4] sm:$0xf]
    %v81 = vld [vmem:[#allocation10 + $0x8] sm:$0xf]
    %v82 = vld [vmem:[#allocation10 + $0xc] sm:$0xf]
    %v83 = vld [vmem:[#allocation10 + $0x10] sm:$0xf]
    %v84 = vld [vmem:[#allocation10 + $0x14] sm:$0xf]
    %v85 = vld [vmem:[#allocation10 + $0x18] sm:$0xf]
    %v86 = vld [vmem:[#allocation10 + $0x1c] sm:$0xf]
    %v87 = vld [vmem:[#allocation10 + $0x20] sm:$0xf]
    %v88 = vld [vmem:[#allocation10 + $0x24] sm:$0xf]
    %v89 = vld [vmem:[#allocation10 + $0x28] sm:$0xf]
    %v90 = vld [vmem:[#allocation10 + $0x2c] sm:$0xf]
    %v91 = vld [vmem:[#allocation10 + $0x30] sm:$0xf]
    %v92 = vld [vmem:[#allocation10 + $0x34] sm:$0xf]
    %v93 = vld [vmem:[#allocation10 + $0x38] sm:$0xf]
    %v94 = vld [vmem:[#allocation10 + $0x3c] sm:$0xf]
    %v111 = vunpack.c.l.b16 %v79
    %v112 = vunpack.c.l.b16 %v80
    %v113 = vunpack.c.l.b16 %v81
    %v114 = vunpack.c.l.b16 %v82
    %v115 = vunpack.c.l.b16 %v83
    %v116 = vunpack.c.l.b16 %v84
    %v117 = vunpack.c.l.b16 %v85
    %v118 = vunpack.c.l.b16 %v86
    %v119 = vunpack.c.l.b16 %v87
    %v120 = vunpack.c.l.b16 %v88
    %v121 = vunpack.c.l.b16 %v89
    %v122 = vunpack.c.l.b16 %v90
    %v123 = vunpack.c.l.b16 %v91
    %v124 = vunpack.c.l.b16 %v92
    %v125 = vunpack.c.l.b16 %v93
    %v126 = vunpack.c.l.b16 %v94
    %v127 = vpack.c.b16 %v112, %v111
    %v128 = vpack.c.b16 %v114, %v113
    %v129 = vpack.c.b16 %v116, %v115
    %v130 = vpack.c.b16 %v118, %v117
    %v131 = vpack.c.b16 %v120, %v119
    %v132 = vpack.c.b16 %v122, %v121
    %v133 = vpack.c.b16 %v124, %v123
    %v134 = vpack.c.b16 %v126, %v125
    %143 = vmatprep.subr.bf16.mxu0 0
    %144 = vmatpush1.bf16.msra.mxu0 %v134
    %145 = vmatprep.subr.bf16.mxu0 0
    %146 = vmatpush1.bf16.msra.mxu0 %v133
    %147 = vmatprep.subr.bf16.mxu0 0
    %148 = vmatpush1.bf16.msra.mxu0 %v132
    %149 = vmatprep.subr.bf16.mxu0 0
    %150 = vmatpush1.bf16.msra.mxu0 %v131
    %151 = vmatprep.subr.bf16.mxu0 0
    %152 = vmatpush1.bf16.msra.mxu0 %v130
    %153 = vmatprep.subr.bf16.mxu0 0
    %154 = vmatpush1.bf16.msra.mxu0 %v129
    %155 = vmatprep.subr.bf16.mxu0 0
    %156 = vmatpush1.bf16.msra.mxu0 %v128
    %157 = vmatprep.subr.bf16.mxu0 0
    %158 = vmatpush1.bf16.msra.mxu0 %v127
    %159 = vmatprep.subr.bf16.mxu0 0
    %160 = vmatpush2.bf16.msra.mxu0 0
    %161 = vmatprep.subr.bf16.mxu0 0
    %162 = vmatpush2.bf16.msra.mxu0 0
    %163 = vmatprep.subr.bf16.mxu0 0
    %164 = vmatpush2.bf16.msra.mxu0 0
    %165 = vmatprep.subr.bf16.mxu0 0
    %166 = vmatpush2.bf16.msra.mxu0 0
    %167 = vmatprep.subr.bf16.mxu0 0
    %168 = vmatpush2.bf16.msra.mxu0 0
    %169 = vmatprep.subr.bf16.mxu0 0
    %170 = vmatpush2.bf16.msra.mxu0 0
    %171 = vmatprep.subr.bf16.mxu0 0
    %172 = vmatpush2.bf16.msra.mxu0 0
    %173 = vmatprep.subr.bf16.mxu0 0
    %174 = vmatpush2.bf16.msra.mxu0 0
    %175 = vmatprep.mubr.bf16.mxu0 0
    %176 = vmatmul.mubr.bf16.gmra.mxu0 %v78
    %v177 = vpop.f32.mrf.mxu0
    %v178 = vadd.f32 0.0, %v177
    %v179 = vpop.f32.mrf.mxu0
    %v180 = vpop.f32.mrf.mxu0
    %v181 = vadd.f32 0.0, %v180
    %v182 = vpop.f32.mrf.mxu0
    %183 = vdwg.mxu0
    %v184 = vmul.f32 %v70, %v74
    %v185 = vmul.f32 %v71, %v75
    %186 = vadd.xlane.f32.xlu0 %v184
    %v187 = vpop.xlane.xlu0 %186
    %188 = vadd.xlane.f32.xlu0 %v185
    %v189 = vpop.xlane.xlu0 %188
    %v190 = vmul.f32 %v178, 4.0
    %v191 = vmul.f32 %v181, 4.0
    %v192 = vmul.f32 %v187, 4.0
    %v193 = vmul.f32 %v189, 4.0
    %v194 = vsub.f32 %v190, %v192
    %v195 = vsub.f32 %v191, %v193
    %v196 = vlaneseq
    %v197 = vand.u32 %v196, 127
    %s198 = smul.u32 0, 16
    %v199 = vlaneseq
    %v200 = vshrl.u32 %v199, 7
    %v201 = vadd.s32 %v200, 8
    %v202 = vstv %s198
    %v203 = vadd.s32 %v202, %v200
    %v204 = vadd.s32 %v202, %v201
    %v205 = vstv %s59
    %vm206 = vcmp.ge.s32.totalorder %v197, %v205
    %vm207 = vcmp.eq.s32.totalorder %v197, %v203
    %vm208 = vcmp.eq.s32.totalorder %v197, %v204
    %v209 = vsel %vm206, 1, 0
    %vm210 = vcmp.eq.s32.totalorder %v209, 1
    %vm211 = vmor %vm210, %vm207
    %vm212 = vmor %vm210, %vm208
    %v213 = vsel %vm211, -1e+30, %v194
    %v214 = vsel %vm212, -1e+30, %v195
    %215 = vmax.xlane.f32.xlu0 %v213
    %v216 = vpop.xlane.xlu0 %215
    %217 = vmax.xlane.f32.xlu0 %v214
    %v218 = vpop.xlane.xlu0 %217
    %v219 = vmax.f32 %v216, 0.0
    %v220 = vmax.f32 %v218, 0.0
    %v221 = vsub.f32 0.0, %v219
    %v222 = vsub.f32 0.0, %v220
    %v223 = vmul.f32 %v221, 1.442695
    %v224 = vpow.pop %v223
    %v225 = vmul.f32 %v222, 1.442695
    %v226 = vpow.pop %v225
    %v227 = vsub.f32 %v213, %v219
    %v228 = vsub.f32 %v214, %v220
    %v229 = vmul.f32 %v227, 1.442695
    %v230 = vpow.pop %v229
    %v231 = vmul.f32 %v228, 1.442695
    %v232 = vpow.pop %v231
    %233 = vadd.xlane.f32.xlu0 %v230
    %v234 = vpop.xlane.xlu0 %233
    %235 = vadd.xlane.f32.xlu0 %v232
    %v236 = vpop.xlane.xlu0 %235
    %v237 = vadd.f32 %v224, %v234
    %v238 = vadd.f32 %v226, %v236
    %v239 = vlog2.pop %v237
    %v240 = vmul.f32 %v239, 0.6931472
    %v241 = vlog2.pop %v238
    %v242 = vmul.f32 %v241, 0.6931472
    %v243 = vadd.f32 %v219, %v240
    %v244 = vadd.f32 %v220, %v242
    %vm245 = vcmp.lt.s32.totalorder %v203, %v205
    %vm246 = vcmp.lt.s32.totalorder %v204, %v205
    %v247 = vsel %vm245, %v243, 0.0
    %v248 = vsel %vm246, %v244, 0.0
    %vm249 = vcmask 7168
    %v250 = vsel %vm249, %v247, 0.0
    %v251 = vsel %vm249, %v248, 0.0
    %v252 = vadd.f32 %v250, %v251
    %253 = vadd.xlane.f32.xlu0 %v252
    %v254 = vpop.xlane.xlu0 %253
    %v255 = vrot.slane %v254, 4
    %v256 = vadd.f32 %v254, %v255
    %v257 = vrot.slane %v256, 2
    %v258 = vadd.f32 %v256, %v257
    %v259 = vrot.slane %v258, 1
    %v260 = vadd.f32 %v258, %v259
    %s261 = vtos %v260
    %v262 = vmul.f32 %v70, %v70
    %v263 = vmul.f32 %v71, %v71
    %v264 = vmul.f32 %v74, %v74
    %v265 = vmul.f32 %v75, %v75
    %v266 = vadd.f32 %v262, %v264
    %v267 = vadd.f32 %v263, %v265
    %v268 = vadd.f32 %v266, %v267
    %269 = vadd.xlane.f32.xlu0 %v268
    %v270 = vpop.xlane.xlu0 %269
    %v271 = vrot.slane %v270, 4
    %v272 = vadd.f32 %v270, %v271
    %v273 = vrot.slane %v272, 2
    %v274 = vadd.f32 %v272, %v273
    %v275 = vrot.slane %v274, 1
    %v276 = vadd.f32 %v274, %v275
    %s277 = vtos %v276
    %s278 = sld [smem:[#allocation2]]
    %s279 = sadd.f32 %s278, %s261
    %s280 = scalar_lea.smem [#allocation2], 0
    %281 = sst [smem:[%s280]] %s279
    %s282 = sld [smem:[#allocation2 + $0x1]]
    %s283 = sadd.f32 %s282, %s277
    %s284 = scalar_lea.smem [#allocation2], 1
    %285 = sst [smem:[%s284]] %s283
    // Predicated region
    $region30: #{tpu_custom_call.1} parent=1 // pred_check
      %p286 = pneg %p60
    $region31: #{tpu_custom_call.1} parent=1 // pred_check_branch
      %288 = sbr.rel (%p286) target = $region33
    $region32: #{tpu_custom_call.1} parent=1 // pred_region
      %s289 = sld [smem:[#allocation2]]
      %s290 = scalar_lea.smem [#allocation11], 0
      %291 = sst [smem:[%s290]] %s289
      %s292 = sld [smem:[#allocation2 + $0x1]]
      %s293 = scalar_lea.smem [#allocation11], 1
      %294 = sst [smem:[%s293]] %s292
    $region33: #{tpu_custom_call.1} parent=1 // pred_fallthru
      _
    // Predicated region
    $region34: #{tpu_custom_call.1} parent=1 // pred_check
      _
    $region35: #{tpu_custom_call.1} parent=1 // pred_check_branch
      %296 = sbr.rel (0) target = $region37
    $region36: #{tpu_custom_call.1} parent=1 // pred_region
      %s298 = ssub.s32 16, 16
      %299 = vsyncadd [#allocation7], %s298
      %302 = dma.smem_to_hbm [#allocation11], 16, %s4, [#allocation7]
    $region37: #{tpu_custom_call.1} parent=1 // pred_fallthru
      _
    // Predicated region
    $region38: #{tpu_custom_call.1} parent=1 // pred_check
      _
    $region39: #{tpu_custom_call.1} parent=1 // pred_check_branch
      %304 = sbr.rel (0) target = $region41
    $region40: #{tpu_custom_call.1} parent=1 // pred_region
      %305 = dma.done [#allocation7], 16
    $region41: #{tpu_custom_call.1} parent=1 // pred_fallthru
      _
    %306 = sfence
    %307 = vsyncpa [#allocation6], 1
    %308 = vsyncpa [#allocation9], 1
    %309 = vsyncpa [#allocation7], 1

// kernel: tpu_custom_call.1
$region0: #{tpu_custom_call.1}
  #allocation0 [shape = 'u32[]', space=smem, size = 0x4, offset = 0x4, fixed_abs, tag = 'smem constant byte address 0x4 - core index']
  #allocation1 [shape = 'u32[144,128]{1,0:T(1,128)}', space=vmem, size = 0x12000, scoped, tag = 'internal scratch']
  #allocation2 [shape = 'f32[2]{0:T(128)}', space=smem, size = 0x200, scoped, tag = 'scratch operand']
  #allocation3 [shape = 's32[1]{0}', space=sflag, size = 0x4, scoped, tag = 'scoped memory for tpu_custom_call.1']
  #allocation4 [shape = 's32[1]{0:T(128)S(6)}', space=smem, size = 0x200, scoped, tag = 'prefetched SMEM operand 0']
  %s0 = inlined_call_operand.<no memory space> [shape: s32[1], index: 0, kind: input, shape index: {}]
  %s1 = inlined_call_operand.hbm [shape: bf16[16,128], index: 1, kind: input, shape index: {}]
  %s2 = inlined_call_operand.hbm [shape: bf16[16,128], index: 2, kind: input, shape index: {}]
  %s3 = inlined_call_operand.hbm [shape: bf16[128,128], index: 3, kind: input, shape index: {}]
  %s4 = inlined_call_operand.hbm [shape: f32[2], index: 4, kind: output, shape index: {}]
  %s5 = sld [smem:[#allocation0]]
  $region42: #{tpu_custom_call.1} parent=0
    _
  %s7 = ssub.s32 1, %s5
  %s8 = scalar_select 0, %s7, %s5
  %9 = sst [smem:[#allocation4]] %s0
  $region1: #{tpu_custom_call.1} parent=0
    #allocation5 [shape = 'u8[4096]{0}', space=vmem, size = 0x1000, scoped, tag = 'input window, operand 1, single buffered']
    #allocation6 [shape = 's32[1]{0}', space=sflag, size = 0x4, scoped, tag = 'scoped memory for tpu_custom_call.1']
    #allocation7 [shape = 's32[1]{0}', space=sflag, size = 0x4, scoped, tag = 'scoped memory for tpu_custom_call.1']
    #allocation8 [shape = 'u8[4096]{0}', space=vmem, size = 0x1000, scoped, tag = 'input window, operand 2, single buffered']
    #allocation9 [shape = 's32[1]{0}', space=sflag, size = 0x4, scoped, tag = 'scoped memory for tpu_custom_call.1']
    #allocation10 [shape = 'u8[32768]{0}', space=vmem, size = 0x8000, scoped, tag = 'input window, operand 3, single buffered']
    #allocation11 [shape = 'u8[512]{0}', space=smem, size = 0x200, scoped, tag = 'output window, operand 0, single buffered']
    %10 = vsyncpa [#allocation6], 0
    %11 = vsyncpa [#allocation9], 0
    %12 = vsyncpa [#allocation7], 0
    // Predicated region
    $region2: #{tpu_custom_call.1} parent=1 // pred_check
      _
    $region3: #{tpu_custom_call.1} parent=1 // pred_check_branch
      %14 = sbr.rel (0) target = $region5
    $region4: #{tpu_custom_call.1} parent=1 // pred_region
      %s16 = ssub.s32 128, 128
      %17 = vsyncadd [#allocation6], %s16
      %s18 = sshll.u32 [#allocation5], 4
      %s19 = int_to_ptr.vmem [resolvable:$true] %s18
      %24 = dma.hbm_to_vmem [thread:$0]  %s1, 128, %s19, [#allocation6], 64, 64, 4
    $region5: #{tpu_custom_call.1} parent=1 // pred_fallthru
      _
    // Predicated region
    $region6: #{tpu_custom_call.1} parent=1 // pred_check
      _
    $region7: #{tpu_custom_call.1} parent=1 // pred_check_branch
      %26 = sbr.rel (0) target = $region9
    $region8: #{tpu_custom_call.1} parent=1 // pred_region
      %s28 = ssub.s32 128, 128
      %29 = vsyncadd [#allocation9], %s28
      %s30 = sshll.u32 [#allocation8], 4
      %s31 = int_to_ptr.vmem [resolvable:$true] %s30
      %36 = dma.hbm_to_vmem [thread:$0]  %s2, 128, %s31, [#allocation9], 64, 64, 4
    $region9: #{tpu_custom_call.1} parent=1 // pred_fallthru
      _
    // Predicated region
    $region10: #{tpu_custom_call.1} parent=1 // pred_check
      _
    $region11: #{tpu_custom_call.1} parent=1 // pred_check_branch
      %38 = sbr.rel (0) target = $region13
    $region12: #{tpu_custom_call.1} parent=1 // pred_region
      %s40 = ssub.s32 1024, 1024
      %41 = vsyncadd [#allocation9], %s40
      %s42 = sshll.u32 [#allocation10], 4
      %s43 = int_to_ptr.vmem [resolvable:$true] %s42
      %48 = dma.hbm_to_vmem [thread:$0]  %s3, 1024, %s43, [#allocation9], 64, 64, 4
    $region13: #{tpu_custom_call.1} parent=1 // pred_fallthru
      _
    // Predicated region
    $region14: #{tpu_custom_call.1} parent=1 // pred_check
      _
    $region15: #{tpu_custom_call.1} parent=1 // pred_check_branch
      %50 = sbr.rel (0) target = $region17
    $region16: #{tpu_custom_call.1} parent=1 // pred_region
      %51 = dma.done [#allocation6], 128
    $region17: #{tpu_custom_call.1} parent=1 // pred_fallthru
      _
    // Predicated region
    $region18: #{tpu_custom_call.1} parent=1 // pred_check
      _
    $region19: #{tpu_custom_call.1} parent=1 // pred_check_branch
      %53 = sbr.rel (0) target = $region21
    $region20: #{tpu_custom_call.1} parent=1 // pred_region
      %54 = dma.done [#allocation9], 128
    $region21: #{tpu_custom_call.1} parent=1 // pred_fallthru
      _
    // Predicated region
    $region22: #{tpu_custom_call.1} parent=1 // pred_check
      _
    $region23: #{tpu_custom_call.1} parent=1 // pred_check_branch
      %56 = sbr.rel (0) target = $region25
    $region24: #{tpu_custom_call.1} parent=1 // pred_region
      %57 = dma.done [#allocation9], 1024
    $region25: #{tpu_custom_call.1} parent=1 // pred_fallthru
      _
    %s59 = sld [smem:[#allocation4]]
    %p60 = scmp.eq.s32.totalorder 0, 0
    // Predicated region
    $region26: #{tpu_custom_call.1} parent=1 // pred_check
      %p61 = pneg %p60
    $region27: #{tpu_custom_call.1} parent=1 // pred_check_branch
      %63 = sbr.rel (%p61) target = $region29
    $region28: #{tpu_custom_call.1} parent=1 // pred_region
      %s64 = scalar_lea.smem [#allocation2], 0
      %65 = sst [smem:[%s64]] 0.0
      %s66 = scalar_lea.smem [#allocation2], 1
      %67 = sst [smem:[%s66]] 0.0
    $region29: #{tpu_custom_call.1} parent=1 // pred_fallthru
      _
    %v68 = vld [vmem:[#allocation5] sm:$0xf]
    %v69 = vld [vmem:[#allocation5 + $0x4] sm:$0xf]
    %v70 = vunpack.c.l.bf16 %v68
    %v71 = vunpack.c.l.bf16 %v69
    %v72 = vld [vmem:[#allocation8] sm:$0xf]
    %v73 = vld [vmem:[#allocation8 + $0x4] sm:$0xf]
    %v74 = vunpack.c.l.bf16 %v72
    %v75 = vunpack.c.l.bf16 %v73
    %v76 = vadd.f32 %v70, %v74
    %v77 = vadd.f32 %v71, %v75
    %v78 = vpack.c.bf16 %v77, %v76
    %v79 = vld [vmem:[#allocation10] sm:$0xf]
    %v80 = vld [vmem:[#allocation10 + $0x4] sm:$0xf]
    %v81 = vld [vmem:[#allocation10 + $0x8] sm:$0xf]
    %v82 = vld [vmem:[#allocation10 + $0xc] sm:$0xf]
    %v83 = vld [vmem:[#allocation10 + $0x10] sm:$0xf]
    %v84 = vld [vmem:[#allocation10 + $0x14] sm:$0xf]
    %v85 = vld [vmem:[#allocation10 + $0x18] sm:$0xf]
    %v86 = vld [vmem:[#allocation10 + $0x1c] sm:$0xf]
    %v87 = vld [vmem:[#allocation10 + $0x20] sm:$0xf]
    %v88 = vld [vmem:[#allocation10 + $0x24] sm:$0xf]
    %v89 = vld [vmem:[#allocation10 + $0x28] sm:$0xf]
    %v90 = vld [vmem:[#allocation10 + $0x2c] sm:$0xf]
    %v91 = vld [vmem:[#allocation10 + $0x30] sm:$0xf]
    %v92 = vld [vmem:[#allocation10 + $0x34] sm:$0xf]
    %v93 = vld [vmem:[#allocation10 + $0x38] sm:$0xf]
    %v94 = vld [vmem:[#allocation10 + $0x3c] sm:$0xf]
    %v111 = vunpack.c.l.b16 %v79
    %v112 = vunpack.c.l.b16 %v80
    %v113 = vunpack.c.l.b16 %v81
    %v114 = vunpack.c.l.b16 %v82
    %v115 = vunpack.c.l.b16 %v83
    %v116 = vunpack.c.l.b16 %v84
    %v117 = vunpack.c.l.b16 %v85
    %v118 = vunpack.c.l.b16 %v86
    %v119 = vunpack.c.l.b16 %v87
    %v120 = vunpack.c.l.b16 %v88
    %v121 = vunpack.c.l.b16 %v89
    %v122 = vunpack.c.l.b16 %v90
    %v123 = vunpack.c.l.b16 %v91
    %v124 = vunpack.c.l.b16 %v92
    %v125 = vunpack.c.l.b16 %v93
    %v126 = vunpack.c.l.b16 %v94
    %v127 = vpack.c.b16 %v112, %v111
    %v128 = vpack.c.b16 %v114, %v113
    %v129 = vpack.c.b16 %v116, %v115
    %v130 = vpack.c.b16 %v118, %v117
    %v131 = vpack.c.b16 %v120, %v119
    %v132 = vpack.c.b16 %v122, %v121
    %v133 = vpack.c.b16 %v124, %v123
    %v134 = vpack.c.b16 %v126, %v125
    %143 = vmatprep.subr.bf16.mxu0 0
    %144 = vmatpush1.bf16.msra.mxu0 %v134
    %145 = vmatprep.subr.bf16.mxu0 0
    %146 = vmatpush1.bf16.msra.mxu0 %v133
    %147 = vmatprep.subr.bf16.mxu0 0
    %148 = vmatpush1.bf16.msra.mxu0 %v132
    %149 = vmatprep.subr.bf16.mxu0 0
    %150 = vmatpush1.bf16.msra.mxu0 %v131
    %151 = vmatprep.subr.bf16.mxu0 0
    %152 = vmatpush1.bf16.msra.mxu0 %v130
    %153 = vmatprep.subr.bf16.mxu0 0
    %154 = vmatpush1.bf16.msra.mxu0 %v129
    %155 = vmatprep.subr.bf16.mxu0 0
    %156 = vmatpush1.bf16.msra.mxu0 %v128
    %157 = vmatprep.subr.bf16.mxu0 0
    %158 = vmatpush1.bf16.msra.mxu0 %v127
    %159 = vmatprep.subr.bf16.mxu0 0
    %160 = vmatpush2.bf16.msra.mxu0 0
    %161 = vmatprep.subr.bf16.mxu0 0
    %162 = vmatpush2.bf16.msra.mxu0 0
    %163 = vmatprep.subr.bf16.mxu0 0
    %164 = vmatpush2.bf16.msra.mxu0 0
    %165 = vmatprep.subr.bf16.mxu0 0
    %166 = vmatpush2.bf16.msra.mxu0 0
    %167 = vmatprep.subr.bf16.mxu0 0
    %168 = vmatpush2.bf16.msra.mxu0 0
    %169 = vmatprep.subr.bf16.mxu0 0
    %170 = vmatpush2.bf16.msra.mxu0 0
    %171 = vmatprep.subr.bf16.mxu0 0
    %172 = vmatpush2.bf16.msra.mxu0 0
    %173 = vmatprep.subr.bf16.mxu0 0
    %174 = vmatpush2.bf16.msra.mxu0 0
    %175 = vmatprep.mubr.bf16.mxu0 0
    %176 = vmatmul.mubr.bf16.gmra.mxu0 %v78
    %v177 = vpop.f32.mrf.mxu0
    %v178 = vadd.f32 0.0, %v177
    %v179 = vpop.f32.mrf.mxu0
    %v180 = vpop.f32.mrf.mxu0
    %v181 = vadd.f32 0.0, %v180
    %v182 = vpop.f32.mrf.mxu0
    %183 = vdwg.mxu0
    %v184 = vmul.f32 %v70, %v74
    %v185 = vmul.f32 %v71, %v75
    %186 = vadd.xlane.f32.xlu0 %v184
    %v187 = vpop.xlane.xlu0 %186
    %188 = vadd.xlane.f32.xlu0 %v185
    %v189 = vpop.xlane.xlu0 %188
    %v190 = vmul.f32 %v178, 4.0
    %v191 = vmul.f32 %v181, 4.0
    %v192 = vmul.f32 %v187, 4.0
    %v193 = vmul.f32 %v189, 4.0
    %v194 = vsub.f32 %v190, %v192
    %v195 = vsub.f32 %v191, %v193
    %v196 = vlaneseq
    %v197 = vand.u32 %v196, 127
    %s198 = smul.u32 0, 16
    %v199 = vlaneseq
    %v200 = vshrl.u32 %v199, 7
    %v201 = vadd.s32 %v200, 8
    %v202 = vstv %s198
    %v203 = vadd.s32 %v202, %v200
    %v204 = vadd.s32 %v202, %v201
    %v205 = vstv %s59
    %vm206 = vcmp.ge.s32.totalorder %v197, %v205
    %vm207 = vcmp.eq.s32.totalorder %v197, %v203
    %vm208 = vcmp.eq.s32.totalorder %v197, %v204
    %v209 = vsel %vm206, 1, 0
    %vm210 = vcmp.eq.s32.totalorder %v209, 1
    %vm211 = vmor %vm210, %vm207
    %vm212 = vmor %vm210, %vm208
    %v213 = vsel %vm211, -1e+30, %v194
    %v214 = vsel %vm212, -1e+30, %v195
    %215 = vmax.xlane.f32.xlu0 %v213
    %v216 = vpop.xlane.xlu0 %215
    %217 = vmax.xlane.f32.xlu0 %v214
    %v218 = vpop.xlane.xlu0 %217
    %v219 = vmax.f32 %v216, 0.0
    %v220 = vmax.f32 %v218, 0.0
    %v221 = vsub.f32 0.0, %v219
    %v222 = vsub.f32 0.0, %v220
    %v223 = vmul.f32 %v221, 1.442695
    %v224 = vpow.pop %v223
    %v225 = vmul.f32 %v222, 1.442695
    %v226 = vpow.pop %v225
    %v227 = vsub.f32 %v213, %v219
    %v228 = vsub.f32 %v214, %v220
    %v229 = vmul.f32 %v227, 1.442695
    %v230 = vpow.pop %v229
    %v231 = vmul.f32 %v228, 1.442695
    %v232 = vpow.pop %v231
    %233 = vadd.xlane.f32.xlu0 %v230
    %v234 = vpop.xlane.xlu0 %233
    %235 = vadd.xlane.f32.xlu0 %v232
    %v236 = vpop.xlane.xlu0 %235
    %v237 = vadd.f32 %v224, %v234
    %v238 = vadd.f32 %v226, %v236
    %v239 = vlog2.pop %v237
    %v240 = vmul.f32 %v239, 0.6931472
    %v241 = vlog2.pop %v238
    %v242 = vmul.f32 %v241, 0.6931472
    %v243 = vadd.f32 %v219, %v240
    %v244 = vadd.f32 %v220, %v242
    %vm245 = vcmp.lt.s32.totalorder %v203, %v205
    %vm246 = vcmp.lt.s32.totalorder %v204, %v205
    %v247 = vsel %vm245, %v243, 0.0
    %v248 = vsel %vm246, %v244, 0.0
    %vm249 = vcmask 7168
    %v250 = vsel %vm249, %v247, 0.0
    %v251 = vsel %vm249, %v248, 0.0
    %v252 = vadd.f32 %v250, %v251
    %253 = vadd.xlane.f32.xlu0 %v252
    %v254 = vpop.xlane.xlu0 %253
    %v255 = vrot.slane %v254, 4
    %v256 = vadd.f32 %v254, %v255
    %v257 = vrot.slane %v256, 2
    %v258 = vadd.f32 %v256, %v257
    %v259 = vrot.slane %v258, 1
    %v260 = vadd.f32 %v258, %v259
    %s261 = vtos %v260
    %v262 = vmul.f32 %v70, %v70
    %v263 = vmul.f32 %v71, %v71
    %v264 = vmul.f32 %v74, %v74
    %v265 = vmul.f32 %v75, %v75
    %v266 = vadd.f32 %v262, %v264
    %v267 = vadd.f32 %v263, %v265
    %v268 = vadd.f32 %v266, %v267
    %269 = vadd.xlane.f32.xlu0 %v268
    %v270 = vpop.xlane.xlu0 %269
    %v271 = vrot.slane %v270, 4
    %v272 = vadd.f32 %v270, %v271
    %v273 = vrot.slane %v272, 2
    %v274 = vadd.f32 %v272, %v273
    %v275 = vrot.slane %v274, 1
    %v276 = vadd.f32 %v274, %v275
    %s277 = vtos %v276
    %s278 = sld [smem:[#allocation2]]
    %s279 = sadd.f32 %s278, %s261
    %s280 = scalar_lea.smem [#allocation2], 0
    %281 = sst [smem:[%s280]] %s279
    %s282 = sld [smem:[#allocation2 + $0x1]]
    %s283 = sadd.f32 %s282, %s277
    %s284 = scalar_lea.smem [#allocation2], 1
    %285 = sst [smem:[%s284]] %s283
    // Predicated region
    $region30: #{tpu_custom_call.1} parent=1 // pred_check
      %p286 = pneg %p60
    $region31: #{tpu_custom_call.1} parent=1 // pred_check_branch
      %288 = sbr.rel (%p286) target = $region33
    $region32: #{tpu_custom_call.1} parent=1 // pred_region
      %s289 = sld [smem:[#allocation2]]
      %s290 = scalar_lea.smem [#allocation11], 0
      %291 = sst [smem:[%s290]] %s289
      %s292 = sld [smem:[#allocation2 + $0x1]]
      %s293 = scalar_lea.smem [#allocation11], 1
      %294 = sst [smem:[%s293]] %s292
    $region33: #{tpu_custom_call.1} parent=1 // pred_fallthru
      _
    // Predicated region
    $region34: #{tpu_custom_call.1} parent=1 // pred_check
      _
    $region35: #{tpu_custom_call.1} parent=1 // pred_check_branch
      %296 = sbr.rel (0) target = $region37
    $region36: #{tpu_custom_call.1} parent=1 // pred_region
      %s298 = ssub.s32 16, 16
      %299 = vsyncadd [#allocation7], %s298
      %302 = dma.smem_to_hbm [#allocation11], 16, %s4, [#allocation7]
    $region37: #{tpu_custom_call.1} parent=1 // pred_fallthru
      _
    // Predicated region
    $region38: #{tpu_custom_call.1} parent=1 // pred_check
      _
    $region39: #{tpu_custom_call.1} parent=1 // pred_check_branch
      %304 = sbr.rel (0) target = $region41
    $region40: #{tpu_custom_call.1} parent=1 // pred_region
      %305 = dma.done [#allocation7], 16
    $region41: #{tpu_custom_call.1} parent=1 // pred_fallthru
      _
    %306 = sfence
    %307 = vsyncpa [#allocation6], 1
    %308 = vsyncpa [#allocation9], 1
    %309 = vsyncpa [#allocation7], 1

</llo_original>
